<compile_context>
chip_gen: v7x
topology: tpu7x:2x2x1
jax: 0.10.0
libtpu: 0.0.40
codegen_flags: <defaults>
</compile_context>

<pallas_src>
import functools

import jax
import jax.numpy as jnp
from jax.experimental import pallas as pl
from jax.experimental.pallas import tpu as pltpu


def _round_up(v, m):
    return (v + m - 1) // m * m


def _vmem_limit(nbytes):
    # computed working-set bytes + headroom, clamped to [16, 48] MiB
    # (48 MiB stays inside v7x's 64 MiB physical VMEM; v5e/v6e have 128 MiB).
    return int(min(max(nbytes + (4 << 20), 16 << 20), 48 << 20))


# --------------------------------------------------------------------------
# Kernel 1: input transform  T1 = (dinv ⊙ X) @ W1      (row-tiled over nodes)
# Only needed for layer 1; later transforms are fused into the preceding
# aggregate's finalize.
# --------------------------------------------------------------------------
def _transform_kernel(dinv_ref, x_ref, w_ref, t_ref):
    xd = (x_ref[...] * dinv_ref[...]).astype(jnp.bfloat16)
    t_ref[...] = jnp.dot(
        xd, w_ref[...], preferred_element_type=jnp.float32
    ).astype(jnp.bfloat16)


def _transform(dinv_p, x_p, w, *, row_tile):
    n_p, f_in_p = x_p.shape
    f_out_p = w.shape[1]
    blk_bytes = 2 * (row_tile * 4 + row_tile * f_in_p * 4
                     + f_in_p * f_out_p * 2 + row_tile * f_out_p * 2)
    return pl.pallas_call(
        _transform_kernel,
        out_shape=jax.ShapeDtypeStruct((n_p, f_out_p), jnp.bfloat16),
        grid_spec=pltpu.PrefetchScalarGridSpec(
            num_scalar_prefetch=0,
            grid=(n_p // row_tile,),
            in_specs=[pl.BlockSpec((row_tile, 1), lambda i: (i, 0)),
                      pl.BlockSpec((row_tile, f_in_p), lambda i: (i, 0)),
                      pl.BlockSpec((f_in_p, f_out_p), lambda i: (0, 0))],
            out_specs=pl.BlockSpec((row_tile, f_out_p), lambda i: (i, 0)),
        ),
        compiler_params=pltpu.CompilerParams(
            dimension_semantics=("parallel",),
            vmem_limit_bytes=_vmem_limit(blk_bytes)),
    )(dinv_p, x_p, w)


# --------------------------------------------------------------------------
# Kernel 2: aggregation
#   acc = (A+I) @ T           (A int8 in HBM, upcast to bf16; f32 accumulate)
#   h   = tanh(dinv ⊙ acc + b)
#   fused variant additionally emits T_next = (dinv ⊙ h) @ W_next  (bf16)
# grid = (row tiles [parallel], reduction tiles over N [arbitrary]);
# T / b / W_next are VMEM-resident (constant index_map).
# --------------------------------------------------------------------------
def _accumulate(k_tile, a_ref, t_ref, acc_ref):
    k = pl.program_id(1)

    @pl.when(k == 0)
    def _():
        acc_ref[...] = jnp.zeros_like(acc_ref)

    start = pl.multiple_of(k * k_tile, k_tile)
    a_blk = a_ref[...].astype(jnp.bfloat16)          # int8 -> bf16 (VPU)
    acc_ref[...] += jnp.dot(a_blk, t_ref[pl.ds(start, k_tile), :],
                            preferred_element_type=jnp.float32)


def _aggregate_fused_kernel(k_tile, a_ref, dinv_ref, t_ref, b_ref, wn_ref,
                            o_ref, acc_ref):
    _accumulate(k_tile, a_ref, t_ref, acc_ref)

    @pl.when(pl.program_id(1) == pl.num_programs(1) - 1)
    def _():
        h = jnp.tanh(dinv_ref[...] * acc_ref[...] + b_ref[...])
        hd = (h * dinv_ref[...]).astype(jnp.bfloat16)
        o_ref[...] = jnp.dot(
            hd, wn_ref[...], preferred_element_type=jnp.float32
        ).astype(jnp.bfloat16)


def _aggregate_final_kernel(k_tile, a_ref, dinv_ref, t_ref, b_ref,
                            o_ref, acc_ref):
    _accumulate(k_tile, a_ref, t_ref, acc_ref)

    @pl.when(pl.program_id(1) == pl.num_programs(1) - 1)
    def _():
        o_ref[...] = jnp.tanh(dinv_ref[...] * acc_ref[...] + b_ref[...])


def _aggregate(a_p, dinv_p, t, b, w_next, *, row_tile, k_tile):
    n_p = a_p.shape[0]
    f_hid_p = t.shape[1]
    fuse = w_next is not None
    f_out_p = w_next.shape[1] if fuse else f_hid_p
    out_dtype = jnp.bfloat16 if fuse else jnp.float32
    out_bytes = 2 if fuse else 4

    in_specs = [
        pl.BlockSpec((row_tile, k_tile), lambda i, k: (i, k)),    # A (int8)
        pl.BlockSpec((row_tile, 1), lambda i, k: (i, 0)),         # dinv
        pl.BlockSpec((n_p, f_hid_p), lambda i, k: (0, 0)),        # T resident
        pl.BlockSpec((1, f_hid_p), lambda i, k: (0, 0)),          # bias
    ]
    args = [a_p, dinv_p, t, b]
    if fuse:
        in_specs.append(pl.BlockSpec((f_hid_p, f_out_p), lambda i, k: (0, 0)))
        args.append(w_next)
        kernel = functools.partial(_aggregate_fused_kernel, k_tile)
    else:
        kernel = functools.partial(_aggregate_final_kernel, k_tile)

    blk_bytes = (2 * row_tile * k_tile * 1        # A blocks (double-buffered)
                 + row_tile * k_tile * 2          # in-kernel bf16 upcast temp
                 + 2 * row_tile * 4               # dinv
                 + 2 * n_p * f_hid_p * 2          # resident T (conservative 2x)
                 + 2 * f_hid_p * 4                # bias
                 + (2 * f_hid_p * f_out_p * 2 if fuse else 0)   # W_next
                 + 2 * row_tile * f_out_p * out_bytes           # output blocks
                 + row_tile * f_hid_p * 4)        # accumulator scratch

    return pl.pallas_call(
        kernel,
        out_shape=jax.ShapeDtypeStruct((n_p, f_out_p), out_dtype),
        grid_spec=pltpu.PrefetchScalarGridSpec(
            num_scalar_prefetch=0,
            grid=(n_p // row_tile, n_p // k_tile),
            in_specs=in_specs,
            out_specs=pl.BlockSpec((row_tile, f_out_p), lambda i, k: (i, 0)),
            scratch_shapes=[pltpu.VMEM((row_tile, f_hid_p), jnp.float32)],
        ),
        compiler_params=pltpu.CompilerParams(
            dimension_semantics=("parallel", "arbitrary"),
            vmem_limit_bytes=_vmem_limit(blk_bytes)),
    )(*args)


# --------------------------------------------------------------------------
# Forward wrapper (glue: padded int8 A+I, dinv from the edge list, padding
# of feature dims to lane width, layer chaining with fused transforms)
# --------------------------------------------------------------------------
def gcn_forward(x, edge_index, params, *, row_tile=None, max_k_tile=2048):
    """x: [N, F_in] float32; edge_index: [2, E] int32 (row=src, col=dst)."""
    n, f_in = x.shape
    w1, b1, w2, b2, w3, b3 = params
    f_out = w3.shape[1]

    # tile selection: 256-row tiles for larger graphs (full v6e/v7x MXU
    # width), 128 for tiny graphs (keeps both v7x cores usable sooner);
    # reduction tile as wide as divides n_p (<= max_k_tile) to amortize the
    # ~0.35us per-grid-step overhead.
    if row_tile is None:
        row_tile = 128 if n <= 256 else 256
    n_p = _round_up(n, row_tile)
    k_tile = row_tile
    while k_tile * 2 <= min(n_p, max_k_tile) and n_p % (k_tile * 2) == 0:
        k_tile *= 2

    # --- glue: padded adjacency (A + I) built directly into the padded
    # buffer (scatter + diagonal scatter; no eye/pad-copy passes), stored as
    # int8 so the dominant HBM stream is half of bf16.  Scatter-add is done
    # in int32 (always supported) and cast once to int8.  Degree comes from
    # the edge list (no N^2 reduction); padded rows get dinv = 0 so they stay
    # neutralized in the kernels. ---
    # TODO(synk): for graphs whose int8 A fits VMEM, keep A resident across
    # all three layers in one kernel (A streamed 1x instead of 3x); for
    # production-scale graphs replace dense A with sparse CSR aggregation via
    # scalar-prefetched row offsets + gather DMA.
    src, dst = edge_index[0].astype(jnp.int32), edge_index[1].astype(jnp.int32)
    e = src.shape[0]
    diag = jnp.arange(n, dtype=jnp.int32)
    a_p = (jnp.zeros((n_p, n_p), jnp.int32)
           .at[dst, src].add(jnp.ones((e,), jnp.int32))
           .at[diag, diag].add(jnp.ones((n,), jnp.int32))
           ).astype(jnp.int8)
    deg = jnp.zeros((n,), jnp.float32).at[dst].add(1.0) + 1.0   # + self loop
    dinv = jax.lax.rsqrt(deg)
    dinv_p = jnp.zeros((n_p, 1), jnp.float32).at[:n, 0].set(dinv)

    # --- zero-pad feature dims to lane width (zeros keep real rows/cols exact)
    f_in_p = _round_up(f_in, 128)
    h1_p = _round_up(w1.shape[1], 128)
    h2_p = _round_up(w2.shape[1], 128)
    f_out_p = _round_up(f_out, 128)

    x_p = jnp.zeros((n_p, f_in_p), jnp.float32).at[:n, :f_in].set(x)

    def pad_w(w, r, c):
        return jnp.zeros((r, c), jnp.bfloat16).at[
            :w.shape[0], :w.shape[1]].set(w.astype(jnp.bfloat16))

    def pad_b(b, c):
        return jnp.zeros((1, c), jnp.float32).at[:, :b.shape[1]].set(b)

    w1_p, b1_p = pad_w(w1, f_in_p, h1_p), pad_b(b1, h1_p)
    w2_p, b2_p = pad_w(w2, h1_p, h2_p), pad_b(b2, h2_p)
    w3_p, b3_p = pad_w(w3, h2_p, f_out_p), pad_b(b3, f_out_p)

    # layer 1 transform, then 3 aggregates; the layer-2 / layer-3 transforms
    # are fused into the preceding aggregate's finalize.
    t1 = _transform(dinv_p, x_p, w1_p, row_tile=row_tile)
    t2 = _aggregate(a_p, dinv_p, t1, b1_p, w2_p,
                    row_tile=row_tile, k_tile=k_tile)
    t3 = _aggregate(a_p, dinv_p, t2, b2_p, w3_p,
                    row_tile=row_tile, k_tile=k_tile)
    h3 = _aggregate(a_p, dinv_p, t3, b3_p, None,
                    row_tile=row_tile, k_tile=k_tile)
    return h3[:n, :f_out]


def init_params(key, f_in, f_out, h1=128, h2=64):
    """Glorot-uniform weights + zero biases, matching GCNConv param shapes."""
    ks = jax.random.split(key, 3)

    def glorot(k, fan_in, fan_out):
        s = jnp.sqrt(6.0 / (fan_in + fan_out))
        return jax.random.uniform(k, (fan_in, fan_out), jnp.float32, -s, s)

    w1 = glorot(ks[0], f_in, h1)
    w2 = glorot(ks[1], h1, h2)
    w3 = glorot(ks[2], h2, f_out)
    b1 = jnp.zeros((1, h1), jnp.float32)
    b2 = jnp.zeros((1, h2), jnp.float32)
    b3 = jnp.zeros((1, f_out), jnp.float32)
    return (w1, b1, w2, b2, w3, b3)


if __name__ == "__main__":
    key = jax.random.PRNGKey(0)
    k_x, k_p = jax.random.split(key)

    N = 8            # number of graph nodes
    F_IN = 16        # Input_feauture_size
    F_OUT = 8        # output_featrue_size

    x = jax.random.normal(k_x, (N, F_IN), jnp.float32)

    # Small symmetric ring graph: edges (i <-> i+1 mod N)
    src = jnp.arange(N, dtype=jnp.int32)
    dst = (src + 1) % N
    edge_index = jnp.stack(
        [jnp.concatenate([src, dst]), jnp.concatenate([dst, src])], axis=0
    )

    params = init_params(k_p, F_IN, F_OUT)

    out = gcn_forward(x, edge_index, params)
    out = jax.block_until_ready(out)

    assert out.shape == (N, F_OUT)
    assert bool(jnp.all(jnp.isfinite(out)))
    assert bool(jnp.all(jnp.abs(out) <= 1.0))  # tanh output range
    print("KERNEL_OK")
</pallas_src>

<mosaic_0001>
module attributes {stable_mosaic.version = 11 : i64} {
  func.func @_transform_kernel(%arg0: i32, %arg1: memref<128x1xf32, #tpu.memory_space<vmem>>, %arg2: memref<128x128xf32, #tpu.memory_space<vmem>>, %arg3: memref<128x128xbf16, #tpu.memory_space<vmem>>, %arg4: memref<128x128xbf16, #tpu.memory_space<vmem>>) attributes {dimension_semantics = [#tpu.dimension_semantics<parallel>], iteration_bounds = array<i64: 1>, scalar_prefetch = 0 : i64, scratch_operands = 0 : i64, tpu.core_type = #tpu.core_type<tc>, window_params = [{transform_indices = @transform_0, window_bounds = array<i64: 128, 1>}, {transform_indices = @transform_1, window_bounds = array<i64: 128, 128>}, {pipeline_mode = #tpu.pipeline_mode<synchronous>, transform_indices = @transform_2, window_bounds = array<i64: 128, 128>}, {transform_indices = @transform_3, window_bounds = array<i64: 128, 128>}]} {
    %c0 = arith.constant 0 : index
    %c0_0 = arith.constant 0 : index
    %0 = vector.load %arg2[%c0, %c0_0] : memref<128x128xf32, #tpu.memory_space<vmem>>, vector<128x128xf32>
    %c0_1 = arith.constant 0 : index
    %c0_2 = arith.constant 0 : index
    %1 = vector.load %arg1[%c0_1, %c0_2] : memref<128x1xf32, #tpu.memory_space<vmem>>, vector<128x1xf32>
    %2 = vector.broadcast %1 : vector<128x1xf32> to vector<128x128xf32>
    %3 = arith.mulf %0, %2 : vector<128x128xf32>
    %4 = arith.truncf %3 : vector<128x128xf32> to vector<128x128xbf16>
    %c0_3 = arith.constant 0 : index
    %c0_4 = arith.constant 0 : index
    %5 = vector.load %arg3[%c0_3, %c0_4] : memref<128x128xbf16, #tpu.memory_space<vmem>>, vector<128x128xbf16>
    %cst = arith.constant dense<0.000000e+00> : vector<128x128xf32>
    %6 = tpu.matmul %4, %5, %cst {dimension_numbers = #tpu.dot_dimension_numbers<[1], [0], [0], [1], [0, 0, 1, 1], [], []>} : vector<128x128xbf16>, vector<128x128xbf16>, vector<128x128xf32> -> vector<128x128xf32>
    %7 = arith.truncf %6 : vector<128x128xf32> to vector<128x128xbf16>
    %c0_5 = arith.constant 0 : index
    %c0_6 = arith.constant 0 : index
    %8 = vector.load %arg4[%c0_5, %c0_6] : memref<128x128xbf16, #tpu.memory_space<vmem>>, vector<128x128xbf16>
    tpu.vector_store %arg4[%c0_5, %c0_6], %7 {strides = array<i32>} : memref<128x128xbf16, #tpu.memory_space<vmem>>, vector<128x128xbf16>,
    return
  }
  func.func @transform_0(%arg0: i32) -> (i32, i32) {
    %c0_i32 = arith.constant 0 : i32
    %c0_i32_0 = arith.constant 0 : i32
    return %arg0, %c0_i32 : i32, i32
  }
  func.func @transform_1(%arg0: i32) -> (i32, i32) {
    %c0_i32 = arith.constant 0 : i32
    %c0_i32_0 = arith.constant 0 : i32
    return %arg0, %c0_i32 : i32, i32
  }
  func.func @transform_2(%arg0: i32) -> (i32, i32) {
    %c0_i32 = arith.constant 0 : i32
    %c0_i32_0 = arith.constant 0 : i32
    %c0_i32_1 = arith.constant 0 : i32
    return %c0_i32, %c0_i32_0 : i32, i32
  }
  func.func @transform_3(%arg0: i32) -> (i32, i32) {
    %c0_i32 = arith.constant 0 : i32
    %c0_i32_0 = arith.constant 0 : i32
    return %arg0, %c0_i32 : i32, i32
  }
}

</mosaic_0001>

<llo_original>
// kernel: tpu_custom_call.1
$region0: #{tpu_custom_call.1}
  #allocation0 [shape = 'u32[]', space=smem, size = 0x4, offset = 0x4, fixed_abs, tag = 'smem constant byte address 0x4 - core index']
  #allocation1 [shape = 'u32[144,128]{1,0:T(1,128)}', space=vmem, size = 0x12000, scoped, tag = 'internal scratch']
  %s0 = inlined_call_operand.vmem [shape: f32[128,1], index: 0, kind: input, shape index: {}]
  %s1 = inlined_call_operand.vmem [shape: f32[128,128], index: 1, kind: input, shape index: {}]
  %s2 = inlined_call_operand.hbm [shape: bf16[128,128], index: 2, kind: input, shape index: {}]
  %s3 = inlined_call_operand.hbm [shape: bf16[128,128], index: 3, kind: output, shape index: {}]
  %s4 = sld [smem:[#allocation0]]
  $region26: #{tpu_custom_call.1} parent=0
    _
  %s6 = ssub.s32 1, %s4
  %s7 = scalar_select 0, %s6, %s4
  $region1: #{tpu_custom_call.1} parent=0
    #allocation2 [shape = 'u8[32768]{0}', space=vmem, size = 0x8000, scoped, tag = 'input window, operand 2, single buffered']
    #allocation3 [shape = 's32[1]{0}', space=sflag, size = 0x4, scoped, tag = 'scoped memory for tpu_custom_call.1']
    #allocation4 [shape = 's32[1]{0}', space=sflag, size = 0x4, scoped, tag = 'scoped memory for tpu_custom_call.1']
    #allocation5 [shape = 'u8[32768]{0}', space=vmem, size = 0x8000, scoped, tag = 'output window, operand 0, single buffered']
    %8 = vsyncpa [#allocation3], 0
    %9 = vsyncpa [#allocation4], 0
    // Predicated region
    $region2: #{tpu_custom_call.1} parent=1 // pred_check
      _
    $region3: #{tpu_custom_call.1} parent=1 // pred_check_branch
      %11 = sbr.rel (0) target = $region5
    $region4: #{tpu_custom_call.1} parent=1 // pred_region
      _
    $region5: #{tpu_custom_call.1} parent=1 // pred_fallthru
      _
    // Predicated region
    $region6: #{tpu_custom_call.1} parent=1 // pred_check
      _
    $region7: #{tpu_custom_call.1} parent=1 // pred_check_branch
      %13 = sbr.rel (0) target = $region9
    $region8: #{tpu_custom_call.1} parent=1 // pred_region
      _
    $region9: #{tpu_custom_call.1} parent=1 // pred_fallthru
      _
    // Predicated region
    $region10: #{tpu_custom_call.1} parent=1 // pred_check
      _
    $region11: #{tpu_custom_call.1} parent=1 // pred_check_branch
      %15 = sbr.rel (0) target = $region13
    $region12: #{tpu_custom_call.1} parent=1 // pred_region
      %s17 = ssub.s32 1024, 1024
      %18 = vsyncadd [#allocation3], %s17
      %s19 = sshll.u32 [#allocation2], 4
      %s20 = int_to_ptr.vmem [resolvable:$true] %s19
      %25 = dma.hbm_to_vmem [thread:$0]  %s2, 1024, %s20, [#allocation3], 64, 64, 4
    $region13: #{tpu_custom_call.1} parent=1 // pred_fallthru
      _
    // Predicated region
    $region14: #{tpu_custom_call.1} parent=1 // pred_check
      _
    $region15: #{tpu_custom_call.1} parent=1 // pred_check_branch
      %27 = sbr.rel (0) target = $region17
    $region16: #{tpu_custom_call.1} parent=1 // pred_region
      %28 = dma.done [#allocation3], 1024
    $region17: #{tpu_custom_call.1} parent=1 // pred_fallthru
      _
    %v30 = vld [vmem:[%s1] sm:$0xff]
    %v31 = vld [vmem:[%s1 + $0x8] sm:$0xff]
    %v32 = vld [vmem:[%s1 + $0x10] sm:$0xff]
    %v33 = vld [vmem:[%s1 + $0x18] sm:$0xff]
    %v34 = vld [vmem:[%s1 + $0x20] sm:$0xff]
    %v35 = vld [vmem:[%s1 + $0x28] sm:$0xff]
    %v36 = vld [vmem:[%s1 + $0x30] sm:$0xff]
    %v37 = vld [vmem:[%s1 + $0x38] sm:$0xff]
    %v38 = vld [vmem:[%s1 + $0x40] sm:$0xff]
    %v39 = vld [vmem:[%s1 + $0x48] sm:$0xff]
    %v40 = vld [vmem:[%s1 + $0x50] sm:$0xff]
    %v41 = vld [vmem:[%s1 + $0x58] sm:$0xff]
    %v42 = vld [vmem:[%s1 + $0x60] sm:$0xff]
    %v43 = vld [vmem:[%s1 + $0x68] sm:$0xff]
    %v44 = vld [vmem:[%s1 + $0x70] sm:$0xff]
    %v45 = vld [vmem:[%s1 + $0x78] sm:$0xff]
    %v46 = vld [vmem:[%s0] sm:$0xff]
    %v47 = vld [vmem:[%s0 + $0x8] sm:$0xff]
    %v48 = vld [vmem:[%s0 + $0x10] sm:$0xff]
    %v49 = vld [vmem:[%s0 + $0x18] sm:$0xff]
    %v50 = vld [vmem:[%s0 + $0x20] sm:$0xff]
    %v51 = vld [vmem:[%s0 + $0x28] sm:$0xff]
    %v52 = vld [vmem:[%s0 + $0x30] sm:$0xff]
    %v53 = vld [vmem:[%s0 + $0x38] sm:$0xff]
    %v54 = vld [vmem:[%s0 + $0x40] sm:$0xff]
    %v55 = vld [vmem:[%s0 + $0x48] sm:$0xff]
    %v56 = vld [vmem:[%s0 + $0x50] sm:$0xff]
    %v57 = vld [vmem:[%s0 + $0x58] sm:$0xff]
    %v58 = vld [vmem:[%s0 + $0x60] sm:$0xff]
    %v59 = vld [vmem:[%s0 + $0x68] sm:$0xff]
    %v60 = vld [vmem:[%s0 + $0x70] sm:$0xff]
    %v61 = vld [vmem:[%s0 + $0x78] sm:$0xff]
    %63 = vset.pattern.permute.xlu0 0
    %64 = vperm.xlu0 %63, %v46
    %v65 = vpop.permute.xlu0 %64
    %68 = vset.pattern.permute.xlu0 0
    %69 = vperm.xlu0 %68, %v47
    %v70 = vpop.permute.xlu0 %69
    %73 = vset.pattern.permute.xlu0 0
    %74 = vperm.xlu0 %73, %v48
    %v75 = vpop.permute.xlu0 %74
    %78 = vset.pattern.permute.xlu0 0
    %79 = vperm.xlu0 %78, %v49
    %v80 = vpop.permute.xlu0 %79
    %83 = vset.pattern.permute.xlu0 0
    %84 = vperm.xlu0 %83, %v50
    %v85 = vpop.permute.xlu0 %84
    %88 = vset.pattern.permute.xlu0 0
    %89 = vperm.xlu0 %88, %v51
    %v90 = vpop.permute.xlu0 %89
    %93 = vset.pattern.permute.xlu0 0
    %94 = vperm.xlu0 %93, %v52
    %v95 = vpop.permute.xlu0 %94
    %98 = vset.pattern.permute.xlu0 0
    %99 = vperm.xlu0 %98, %v53
    %v100 = vpop.permute.xlu0 %99
    %103 = vset.pattern.permute.xlu0 0
    %104 = vperm.xlu0 %103, %v54
    %v105 = vpop.permute.xlu0 %104
    %108 = vset.pattern.permute.xlu0 0
    %109 = vperm.xlu0 %108, %v55
    %v110 = vpop.permute.xlu0 %109
    %113 = vset.pattern.permute.xlu0 0
    %114 = vperm.xlu0 %113, %v56
    %v115 = vpop.permute.xlu0 %114
    %118 = vset.pattern.permute.xlu0 0
    %119 = vperm.xlu0 %118, %v57
    %v120 = vpop.permute.xlu0 %119
    %123 = vset.pattern.permute.xlu0 0
    %124 = vperm.xlu0 %123, %v58
    %v125 = vpop.permute.xlu0 %124
    %128 = vset.pattern.permute.xlu0 0
    %129 = vperm.xlu0 %128, %v59
    %v130 = vpop.permute.xlu0 %129
    %133 = vset.pattern.permute.xlu0 0
    %134 = vperm.xlu0 %133, %v60
    %v135 = vpop.permute.xlu0 %134
    %138 = vset.pattern.permute.xlu0 0
    %139 = vperm.xlu0 %138, %v61
    %v140 = vpop.permute.xlu0 %139
    %v142 = vmul.f32 %v30, %v65
    %v143 = vmul.f32 %v31, %v70
    %v144 = vmul.f32 %v32, %v75
    %v145 = vmul.f32 %v33, %v80
    %v146 = vmul.f32 %v34, %v85
    %v147 = vmul.f32 %v35, %v90
    %v148 = vmul.f32 %v36, %v95
    %v149 = vmul.f32 %v37, %v100
    %v150 = vmul.f32 %v38, %v105
    %v151 = vmul.f32 %v39, %v110
    %v152 = vmul.f32 %v40, %v115
    %v153 = vmul.f32 %v41, %v120
    %v154 = vmul.f32 %v42, %v125
    %v155 = vmul.f32 %v43, %v130
    %v156 = vmul.f32 %v44, %v135
    %v157 = vmul.f32 %v45, %v140
    %v158 = vpack.c.bf16 %v143, %v142
    %v159 = vpack.c.bf16 %v145, %v144
    %v160 = vpack.c.bf16 %v147, %v146
    %v161 = vpack.c.bf16 %v149, %v148
    %v162 = vpack.c.bf16 %v151, %v150
    %v163 = vpack.c.bf16 %v153, %v152
    %v164 = vpack.c.bf16 %v155, %v154
    %v165 = vpack.c.bf16 %v157, %v156
    %v166 = vld [vmem:[#allocation2] sm:$0xf]
    %v167 = vld [vmem:[#allocation2 + $0x4] sm:$0xf]
    %v168 = vld [vmem:[#allocation2 + $0x8] sm:$0xf]
    %v169 = vld [vmem:[#allocation2 + $0xc] sm:$0xf]
    %v170 = vld [vmem:[#allocation2 + $0x10] sm:$0xf]
    %v171 = vld [vmem:[#allocation2 + $0x14] sm:$0xf]
    %v172 = vld [vmem:[#allocation2 + $0x18] sm:$0xf]
    %v173 = vld [vmem:[#allocation2 + $0x1c] sm:$0xf]
    %v174 = vld [vmem:[#allocation2 + $0x20] sm:$0xf]
    %v175 = vld [vmem:[#allocation2 + $0x24] sm:$0xf]
    %v176 = vld [vmem:[#allocation2 + $0x28] sm:$0xf]
    %v177 = vld [vmem:[#allocation2 + $0x2c] sm:$0xf]
    %v178 = vld [vmem:[#allocation2 + $0x30] sm:$0xf]
    %v179 = vld [vmem:[#allocation2 + $0x34] sm:$0xf]
    %v180 = vld [vmem:[#allocation2 + $0x38] sm:$0xf]
    %v181 = vld [vmem:[#allocation2 + $0x3c] sm:$0xf]
    %v198 = vunpack.c.l.b16 %v166
    %v199 = vunpack.c.l.b16 %v167
    %v200 = vunpack.c.l.b16 %v168
    %v201 = vunpack.c.l.b16 %v169
    %v202 = vunpack.c.l.b16 %v170
    %v203 = vunpack.c.l.b16 %v171
    %v204 = vunpack.c.l.b16 %v172
    %v205 = vunpack.c.l.b16 %v173
    %v206 = vunpack.c.l.b16 %v174
    %v207 = vunpack.c.l.b16 %v175
    %v208 = vunpack.c.l.b16 %v176
    %v209 = vunpack.c.l.b16 %v177
    %v210 = vunpack.c.l.b16 %v178
    %v211 = vunpack.c.l.b16 %v179
    %v212 = vunpack.c.l.b16 %v180
    %v213 = vunpack.c.l.b16 %v181
    %v214 = vpack.c.b16 %v199, %v198
    %v215 = vpack.c.b16 %v201, %v200
    %v216 = vpack.c.b16 %v203, %v202
    %v217 = vpack.c.b16 %v205, %v204
    %v218 = vpack.c.b16 %v207, %v206
    %v219 = vpack.c.b16 %v209, %v208
    %v220 = vpack.c.b16 %v211, %v210
    %v221 = vpack.c.b16 %v213, %v212
    %230 = vmatprep.subr.bf16.mxu0 0
    %231 = vmatpush1.bf16.msra.mxu0 %v214
    %232 = vmatprep.subr.bf16.mxu0 0
    %233 = vmatpush1.bf16.msra.mxu0 %v215
    %234 = vmatprep.subr.bf16.mxu0 0
    %235 = vmatpush1.bf16.msra.mxu0 %v216
    %236 = vmatprep.subr.bf16.mxu0 0
    %237 = vmatpush1.bf16.msra.mxu0 %v217
    %238 = vmatprep.subr.bf16.mxu0 0
    %239 = vmatpush1.bf16.msra.mxu0 %v218
    %240 = vmatprep.subr.bf16.mxu0 0
    %241 = vmatpush1.bf16.msra.mxu0 %v219
    %242 = vmatprep.subr.bf16.mxu0 0
    %243 = vmatpush1.bf16.msra.mxu0 %v220
    %244 = vmatprep.subr.bf16.mxu0 0
    %245 = vmatpush1.bf16.msra.mxu0 %v221
    %246 = vmatprep.subr.bf16.mxu0 0
    %247 = vmatpush1.bf16.msra.mxu0 0
    %248 = vmatprep.subr.bf16.mxu0 0
    %249 = vmatpush1.bf16.msra.mxu0 0
    %250 = vmatprep.subr.bf16.mxu0 0
    %251 = vmatpush1.bf16.msra.mxu0 0
    %252 = vmatprep.subr.bf16.mxu0 0
    %253 = vmatpush1.bf16.msra.mxu0 0
    %254 = vmatprep.subr.bf16.mxu0 0
    %255 = vmatpush1.bf16.msra.mxu0 0
    %256 = vmatprep.subr.bf16.mxu0 0
    %257 = vmatpush1.bf16.msra.mxu0 0
    %258 = vmatprep.subr.bf16.mxu0 0
    %259 = vmatpush1.bf16.msra.mxu0 0
    %260 = vmatprep.subr.bf16.mxu0 0
    %261 = vmatpush1.bf16.msra.mxu0 0
    %262 = vmatprep.mubr.bf16.mxu0 0
    %263 = vmatmul.mubr.bf16.gmra.mrb[0].mxu0 %v158
    %v264 = vpop.f32.mrb[0].mxu0
    %v265 = vadd.f32 0.0, %v264
    %v266 = vpop.f32.mrb[0].mxu0
    %v267 = vpop.f32.mrb[0].mxu0
    %v268 = vadd.f32 0.0, %v267
    %v269 = vpop.f32.mrb[0].mxu0
    %270 = vmatprep.mubr.bf16.mxu0 0
    %271 = vmatmul.mubr.bf16.gmra.mrb[0].mxu0 %v159
    %v272 = vpop.f32.mrb[0].mxu0
    %v273 = vadd.f32 0.0, %v272
    %v274 = vpop.f32.mrb[0].mxu0
    %v275 = vpop.f32.mrb[0].mxu0
    %v276 = vadd.f32 0.0, %v275
    %v277 = vpop.f32.mrb[0].mxu0
    %278 = vmatprep.mubr.bf16.mxu0 0
    %279 = vmatmul.mubr.bf16.gmra.mrb[0].mxu0 %v160
    %v280 = vpop.f32.mrb[0].mxu0
    %v281 = vadd.f32 0.0, %v280
    %v282 = vpop.f32.mrb[0].mxu0
    %v283 = vpop.f32.mrb[0].mxu0
    %v284 = vadd.f32 0.0, %v283
    %v285 = vpop.f32.mrb[0].mxu0
    %286 = vmatprep.mubr.bf16.mxu0 0
    %287 = vmatmul.mubr.bf16.gmra.mrb[0].mxu0 %v161
    %v288 = vpop.f32.mrb[0].mxu0
    %v289 = vadd.f32 0.0, %v288
    %v290 = vpop.f32.mrb[0].mxu0
    %v291 = vpop.f32.mrb[0].mxu0
    %v292 = vadd.f32 0.0, %v291
    %v293 = vpop.f32.mrb[0].mxu0
    %294 = vmatprep.mubr.bf16.mxu0 0
    %295 = vmatmul.mubr.bf16.gmra.mrb[0].mxu0 %v162
    %v296 = vpop.f32.mrb[0].mxu0
    %v297 = vadd.f32 0.0, %v296
    %v298 = vpop.f32.mrb[0].mxu0
    %v299 = vpop.f32.mrb[0].mxu0
    %v300 = vadd.f32 0.0, %v299
    %v301 = vpop.f32.mrb[0].mxu0
    %302 = vmatprep.mubr.bf16.mxu0 0
    %303 = vmatmul.mubr.bf16.gmra.mrb[0].mxu0 %v163
    %v304 = vpop.f32.mrb[0].mxu0
    %v305 = vadd.f32 0.0, %v304
    %v306 = vpop.f32.mrb[0].mxu0
    %v307 = vpop.f32.mrb[0].mxu0
    %v308 = vadd.f32 0.0, %v307
    %v309 = vpop.f32.mrb[0].mxu0
    %310 = vmatprep.mubr.bf16.mxu0 0
    %311 = vmatmul.mubr.bf16.gmra.mrb[0].mxu0 %v164
    %v312 = vpop.f32.mrb[0].mxu0
    %v313 = vadd.f32 0.0, %v312
    %v314 = vpop.f32.mrb[0].mxu0
    %v315 = vpop.f32.mrb[0].mxu0
    %v316 = vadd.f32 0.0, %v315
    %v317 = vpop.f32.mrb[0].mxu0
    %318 = vmatprep.mubr.bf16.mxu0 0
    %319 = vmatmul.mubr.bf16.gmra.mrb[0].mxu0 %v165
    %v320 = vpop.f32.mrb[0].mxu0
    %v321 = vadd.f32 0.0, %v320
    %v322 = vpop.f32.mrb[0].mxu0
    %v323 = vpop.f32.mrb[0].mxu0
    %v324 = vadd.f32 0.0, %v323
    %v325 = vpop.f32.mrb[0].mxu0
    %326 = vdwg.mxu0
    %v327 = vpack.c.bf16 %v268, %v265
    %v328 = vpack.c.bf16 %v276, %v273
    %v329 = vpack.c.bf16 %v284, %v281
    %v330 = vpack.c.bf16 %v292, %v289
    %v331 = vpack.c.bf16 %v300, %v297
    %v332 = vpack.c.bf16 %v308, %v305
    %v333 = vpack.c.bf16 %v316, %v313
    %v334 = vpack.c.bf16 %v324, %v321
    %v343 = vunpack.c.l.b16 %v327
    %v344 = vunpack.c.h.b16 %v327
    %v345 = vunpack.c.l.b16 %v328
    %v346 = vunpack.c.h.b16 %v328
    %v347 = vunpack.c.l.b16 %v329
    %v348 = vunpack.c.h.b16 %v329
    %v349 = vunpack.c.l.b16 %v330
    %v350 = vunpack.c.h.b16 %v330
    %v351 = vunpack.c.l.b16 %v331
    %v352 = vunpack.c.h.b16 %v331
    %v353 = vunpack.c.l.b16 %v332
    %v354 = vunpack.c.h.b16 %v332
    %v355 = vunpack.c.l.b16 %v333
    %v356 = vunpack.c.h.b16 %v333
    %v357 = vunpack.c.l.b16 %v334
    %v358 = vunpack.c.h.b16 %v334
    %v359 = vpack.c.b16 %v343, %v343
    %v360 = vpack.c.b16 %v344, %v344
    %v361 = vpack.c.b16 %v345, %v345
    %v362 = vpack.c.b16 %v346, %v346
    %v363 = vpack.c.b16 %v347, %v347
    %v364 = vpack.c.b16 %v348, %v348
    %v365 = vpack.c.b16 %v349, %v349
    %v366 = vpack.c.b16 %v350, %v350
    %v367 = vpack.c.b16 %v351, %v351
    %v368 = vpack.c.b16 %v352, %v352
    %v369 = vpack.c.b16 %v353, %v353
    %v370 = vpack.c.b16 %v354, %v354
    %v371 = vpack.c.b16 %v355, %v355
    %v372 = vpack.c.b16 %v356, %v356
    %v373 = vpack.c.b16 %v357, %v357
    %v374 = vpack.c.b16 %v358, %v358
    %391 = vst [vmem:[#allocation5] sm:$0xf] %v359
    %392 = vst [vmem:[#allocation5 + $0x4] sm:$0xf] %v360
    %393 = vst [vmem:[#allocation5 + $0x8] sm:$0xf] %v361
    %394 = vst [vmem:[#allocation5 + $0xc] sm:$0xf] %v362
    %395 = vst [vmem:[#allocation5 + $0x10] sm:$0xf] %v363
    %396 = vst [vmem:[#allocation5 + $0x14] sm:$0xf] %v364
    %397 = vst [vmem:[#allocation5 + $0x18] sm:$0xf] %v365
    %398 = vst [vmem:[#allocation5 + $0x1c] sm:$0xf] %v366
    %399 = vst [vmem:[#allocation5 + $0x20] sm:$0xf] %v367
    %400 = vst [vmem:[#allocation5 + $0x24] sm:$0xf] %v368
    %401 = vst [vmem:[#allocation5 + $0x28] sm:$0xf] %v369
    %402 = vst [vmem:[#allocation5 + $0x2c] sm:$0xf] %v370
    %403 = vst [vmem:[#allocation5 + $0x30] sm:$0xf] %v371
    %404 = vst [vmem:[#allocation5 + $0x34] sm:$0xf] %v372
    %405 = vst [vmem:[#allocation5 + $0x38] sm:$0xf] %v373
    %406 = vst [vmem:[#allocation5 + $0x3c] sm:$0xf] %v374
    // Predicated region
    $region18: #{tpu_custom_call.1} parent=1 // pred_check
      _
    $region19: #{tpu_custom_call.1} parent=1 // pred_check_branch
      %408 = sbr.rel (0) target = $region21
    $region20: #{tpu_custom_call.1} parent=1 // pred_region
      %s410 = ssub.s32 1024, 1024
      %411 = vsyncadd [#allocation4], %s410
      %s412 = sshll.u32 [#allocation5], 4
      %s413 = int_to_ptr.vmem [resolvable:$true] %s412
      %418 = dma.vmem_to_hbm [thread:$0]  %s413, 1024, %s3, [#allocation4], 64, 64, 4
    $region21: #{tpu_custom_call.1} parent=1 // pred_fallthru
      _
    // Predicated region
    $region22: #{tpu_custom_call.1} parent=1 // pred_check
      _
    $region23: #{tpu_custom_call.1} parent=1 // pred_check_branch
      %420 = sbr.rel (0) target = $region25
    $region24: #{tpu_custom_call.1} parent=1 // pred_region
      %421 = dma.done [#allocation4], 1024
    $region25: #{tpu_custom_call.1} parent=1 // pred_fallthru
      _
    %422 = vsyncpa [#allocation3], 1
    %423 = vsyncpa [#allocation4], 1

</llo_original>
